<compile_context>
chip_gen: v7x
topology: tpu7x:2x2x1
jax: 0.10.0
libtpu: 0.0.40
codegen_flags: <defaults>
</compile_context>

<pallas_src>
import functools

import jax
import jax.numpy as jnp
from jax.experimental import pallas as pl
from jax.experimental.pallas import tpu as pltpu

_LANE = 128
_SUBLANE = 8


# ----------------------------- kernels --------------------------------------


def _finish(x_f32, ms, w_ref, o_ref, *, eps, in_dtype, strict_dtype_parity):
    normed = x_f32 * jax.lax.rsqrt(ms + eps)
    # torch parity: _norm(x.float()).type_as(x) — the downcast round-trip only
    # changes results for sub-f32 inputs.  It is pure extra VALU work, so it is
    # gateable (skip on v7x if strict bit-parity with torch is not required).
    if strict_dtype_parity and in_dtype != jnp.float32:
        normed = normed.astype(in_dtype).astype(jnp.float32)
    out = normed * w_ref[...].astype(jnp.float32)
    o_ref[...] = out.astype(o_ref.dtype)


def _rmsnorm_kernel(x_ref, w_ref, o_ref, *, eps, inv_dim, strict_dtype_parity):
    # x_ref: (tile_rows, dim), w_ref: (1, dim), o_ref: (tile_rows, dim).
    # Block last dim equals the true dim (no wrapper padding), so the reduction
    # is over exactly `dim` logical lanes; Mosaic masks physical lane padding.
    x = x_ref[...].astype(jnp.float32)
    ms = jnp.sum(x * x, axis=-1, keepdims=True) * inv_dim
    _finish(x, ms, w_ref, o_ref, eps=eps, in_dtype=x_ref.dtype,
            strict_dtype_parity=strict_dtype_parity)


def _rmsnorm_packed_kernel(x_ref, w_ref, seg_ref, o_ref, *, eps, inv_dim,
                           strict_dtype_parity):
    # Packed small-dim path: k = 128 // dim logical rows per 128-lane row.
    # seg_ref is a (128, 128) block-diagonal ones matrix; (x*x) @ seg gives
    # every lane the sum of squares of its own dim-sized segment (one tiny MXU
    # matmul, no cross-lane reshapes).
    x = x_ref[...].astype(jnp.float32)
    ms = jnp.dot(x * x, seg_ref[...], preferred_element_type=jnp.float32) * inv_dim
    _finish(x, ms, w_ref, o_ref, eps=eps, in_dtype=x_ref.dtype,
            strict_dtype_parity=strict_dtype_parity)


# ----------------------------- wrapper ---------------------------------------


def _vmem_capacity_bytes():
    try:
        info = pltpu.get_tpu_info()
        cap = getattr(info, "vmem_capacity_bytes", None)
        if cap:
            return int(cap)
    except Exception:
        pass
    # Conservative fallback: v7x per-TensorCore VMEM.
    return 64 * 1024 * 1024


def _round_up(v, m):
    return ((v + m - 1) // m) * m


def _auto_tile_rows(rows, dim_lanes_vmem, dim_logical, in_bytes, out_bytes,
                    vmem_limit):
    # VMEM per row per grid step: 2x double-buffered input, 2x double-buffered
    # output, plus ~8 B/elem of live f32 intermediates (x.float() and the
    # normalized product) — relevant under v7x's 32 MiB scoped limit.
    per_row_vmem = dim_lanes_vmem * (2 * in_bytes + 2 * out_bytes + 8)
    budget = int(0.8 * vmem_limit)
    vmem_rows = max(_SUBLANE, budget // max(per_row_vmem, 1))
    # Bytes-based target instead of a fixed row cap: ~16 MiB of (read + write)
    # HBM traffic per grid step keeps the ~0.35 us/step grid overhead small
    # even at v7x's ~3.2 TB/s.
    traffic_per_row = max(dim_logical * (in_bytes + out_bytes), 1)
    target_rows = pl.cdiv(16 * 1024 * 1024, traffic_per_row)
    t = min(vmem_rows, target_rows)
    t = max(_SUBLANE, (t // _SUBLANE) * _SUBLANE)
    if rows <= t:
        return _round_up(rows, _SUBLANE)   # single grid step
    return t


def rmsnorm(x, weight, eps=1e-6, tile_rows=None, out_dtype=None,
            strict_dtype_parity=True, use_core_parallel=False):
    """RMSNorm over the last axis of x; weight has shape (dim,).

    out_dtype=None reproduces torch semantics (sub-f32 inputs promote to f32
    via the f32 weight).  Pass out_dtype=x.dtype for a lower-write-traffic
    output when the caller accepts it.  strict_dtype_parity=False skips the
    torch `.type_as(x)` downcast round-trip (extra VALU work; can bind on v7x).
    use_core_parallel=True requests CORE_PARALLEL grid sharding for v7x's two
    TensorCores (leave False on single-TC v5e/v6e).
    """
    orig_shape = x.shape
    dim = orig_shape[-1]
    rows = 1
    for s in orig_shape[:-1]:
        rows *= s

    if out_dtype is None:
        out_dtype = jnp.promote_types(x.dtype, weight.dtype)
    in_bytes = jnp.dtype(x.dtype).itemsize
    out_bytes = jnp.dtype(out_dtype).itemsize

    # Generation-aware scoped-VMEM budget: half of physical, capped at 64 MiB
    # (v5e/v6e: 128 MiB -> 64 MiB; v7x: 64 MiB/TC -> 32 MiB).
    vmem_limit = int(min(_vmem_capacity_bytes() // 2, 64 * 1024 * 1024))
    semantics = pltpu.CORE_PARALLEL if use_core_parallel else "parallel"

    # Small-dim packing: place k = 128 // dim logical rows in one lane-row so
    # no DMA byte or store lane is wasted (plain layout wastes (128-dim)/128 of
    # bandwidth for dim < 128).  Only when rows pack evenly (padding rows would
    # itself cost a full extra HBM pass).
    k = _LANE // dim if (0 < dim < _LANE and _LANE % dim == 0) else 0
    pack = k > 0 and rows >= k and rows % k == 0

    if pack:
        prows = rows // k
        x2d = x.reshape(prows, _LANE)
        w2d = jnp.tile(weight.reshape(1, dim), (1, k))
        lane_ids = jnp.arange(_LANE, dtype=jnp.int32)
        seg = (lane_ids[:, None] // dim == lane_ids[None, :] // dim)
        seg = seg.astype(jnp.float32)

        if tile_rows is None:
            tr = _auto_tile_rows(prows, _LANE, _LANE, in_bytes, out_bytes,
                                 vmem_limit)
        else:
            tr = max(_SUBLANE, _round_up(tile_rows, _SUBLANE))
        grid = (pl.cdiv(prows, tr),)

        out2d = pl.pallas_call(
            functools.partial(_rmsnorm_packed_kernel, eps=eps,
                              inv_dim=1.0 / dim,
                              strict_dtype_parity=strict_dtype_parity),
            out_shape=jax.ShapeDtypeStruct((prows, _LANE), out_dtype),
            grid_spec=pltpu.PrefetchScalarGridSpec(
                num_scalar_prefetch=0,
                grid=grid,
                in_specs=[
                    pl.BlockSpec((tr, _LANE), lambda i: (i, 0)),
                    pl.BlockSpec((1, _LANE), lambda i: (0, 0)),
                    pl.BlockSpec((_LANE, _LANE), lambda i: (0, 0)),
                ],
                out_specs=pl.BlockSpec((tr, _LANE), lambda i: (i, 0)),
            ),
            compiler_params=pltpu.CompilerParams(
                dimension_semantics=(semantics,),
                vmem_limit_bytes=vmem_limit,
            ),
        )(x2d, w2d, seg)
        return out2d.reshape(orig_shape)

    # Plain path: block last dim equals the full dim (no wrapper pad / slice).
    x2d = x.reshape(rows, dim)
    w2d = weight.reshape(1, dim)
    dim_vmem = _round_up(dim, _LANE)   # physical lane footprint in VMEM

    if tile_rows is None:
        tr = _auto_tile_rows(rows, dim_vmem, dim, in_bytes, out_bytes,
                             vmem_limit)
    else:
        tr = max(_SUBLANE, _round_up(tile_rows, _SUBLANE))
    grid = (pl.cdiv(rows, tr),)

    out2d = pl.pallas_call(
        functools.partial(_rmsnorm_kernel, eps=eps, inv_dim=1.0 / dim,
                          strict_dtype_parity=strict_dtype_parity),
        out_shape=jax.ShapeDtypeStruct((rows, dim), out_dtype),
        grid_spec=pltpu.PrefetchScalarGridSpec(
            num_scalar_prefetch=0,
            grid=grid,
            in_specs=[
                pl.BlockSpec((tr, dim), lambda i: (i, 0)),
                pl.BlockSpec((1, dim), lambda i: (0, 0)),
            ],
            out_specs=pl.BlockSpec((tr, dim), lambda i: (i, 0)),
        ),
        compiler_params=pltpu.CompilerParams(
            dimension_semantics=(semantics,),
            vmem_limit_bytes=vmem_limit,
        ),
    )(x2d, w2d)
    return out2d.reshape(orig_shape)


def rmsnorm_reference(x, weight, eps=1e-6):
    xf = x.astype(jnp.float32)
    ms = jnp.mean(xf * xf, axis=-1, keepdims=True)
    normed = (xf * jax.lax.rsqrt(ms + eps)).astype(x.dtype)
    return normed * weight


if __name__ == "__main__":
    key = jax.random.PRNGKey(0)
    batch, seq, dim = 2, 8, 32

    x = jax.random.normal(key, (batch, seq, dim), dtype=jnp.float32)
    # torch.ones(dim) equivalent, deterministically perturbed so the weight
    # multiply is actually exercised.
    weight = jnp.ones((dim,), dtype=jnp.float32) + 0.01 * jnp.arange(
        dim, dtype=jnp.float32)

    # 1) f32 input — small-dim packed path (dim=32 -> 4 logical rows per lane-row).
    out = rmsnorm(x, weight)
    jax.block_until_ready(out)
    ref = rmsnorm_reference(x, weight)
    assert out.shape == x.shape, (out.shape, x.shape)
    assert out.dtype == ref.dtype, (out.dtype, ref.dtype)
    assert jnp.allclose(out, ref, atol=1e-5, rtol=1e-5), "f32 packed mismatch"

    # 2) bf16 input, torch parity (bf16 normed * f32 weight -> f32 output).
    xb = x.astype(jnp.bfloat16)
    outb = rmsnorm(xb, weight)
    jax.block_until_ready(outb)
    refb = rmsnorm_reference(xb, weight)
    assert outb.dtype == refb.dtype, (outb.dtype, refb.dtype)
    assert jnp.allclose(outb, refb, atol=2e-2, rtol=2e-2), "bf16 parity mismatch"

    # 2b) opt-in bf16-output fast path with the parity round-trip skipped.
    outb16 = rmsnorm(xb, weight, out_dtype=jnp.bfloat16,
                     strict_dtype_parity=False)
    jax.block_until_ready(outb16)
    assert outb16.dtype == jnp.bfloat16
    assert jnp.allclose(outb16.astype(jnp.float32), refb, atol=3e-2,
                        rtol=3e-2), "bf16 fast-path mismatch"

    # 3) ragged rows (15 % 4 != 0) -> plain path, masked-tail grid block,
    #    non-128 last dim with no wrapper pad.
    x3 = jax.random.normal(jax.random.PRNGKey(1), (3, 5, dim), dtype=jnp.float32)
    out3 = rmsnorm(x3, weight, tile_rows=8)
    jax.block_until_ready(out3)
    ref3 = rmsnorm_reference(x3, weight)
    assert jnp.allclose(out3, ref3, atol=1e-5, rtol=1e-5), "ragged mismatch"

    # 4) lane-exact dim (128): plain path with unmasked full-lane stores.
    dim4 = 128
    x4 = jax.random.normal(jax.random.PRNGKey(2), (2, 8, dim4), dtype=jnp.float32)
    w4 = jnp.ones((dim4,), dtype=jnp.float32) + 0.01 * jnp.arange(
        dim4, dtype=jnp.float32)
    out4 = rmsnorm(x4, w4)
    jax.block_until_ready(out4)
    ref4 = rmsnorm_reference(x4, w4)
    assert jnp.allclose(out4, ref4, atol=1e-5, rtol=1e-5), "dim=128 mismatch"

    print("KERNEL_OK")
</pallas_src>

<mosaic_0001>
module attributes {stable_mosaic.version = 11 : i64} {
  func.func @_rmsnorm_packed_kernel(%arg0: i32, %arg1: memref<8x128xf32, #tpu.memory_space<vmem>>, %arg2: memref<1x128xf32, #tpu.memory_space<vmem>>, %arg3: memref<128x128xf32, #tpu.memory_space<vmem>>, %arg4: memref<8x128xf32, #tpu.memory_space<vmem>>) attributes {dimension_semantics = [#tpu.dimension_semantics<parallel>], iteration_bounds = array<i64: 1>, scalar_prefetch = 0 : i64, scratch_operands = 0 : i64, tpu.core_type = #tpu.core_type<tc>, window_params = [{transform_indices = @transform_0, window_bounds = array<i64: 8, 128>}, {pipeline_mode = #tpu.pipeline_mode<synchronous>, transform_indices = @transform_1, window_bounds = array<i64: 1, 128>}, {pipeline_mode = #tpu.pipeline_mode<synchronous>, transform_indices = @transform_2, window_bounds = array<i64: 128, 128>}, {transform_indices = @transform_3, window_bounds = array<i64: 8, 128>}]} {
    %c0 = arith.constant 0 : index
    %c0_0 = arith.constant 0 : index
    %0 = vector.load %arg1[%c0, %c0_0] : memref<8x128xf32, #tpu.memory_space<vmem>>, vector<8x128xf32>
    %1 = arith.mulf %0, %0 : vector<8x128xf32>
    %c0_1 = arith.constant 0 : index
    %c0_2 = arith.constant 0 : index
    %2 = vector.load %arg3[%c0_1, %c0_2] : memref<128x128xf32, #tpu.memory_space<vmem>>, vector<128x128xf32>
    %cst = arith.constant dense<0.000000e+00> : vector<8x128xf32>
    %3 = tpu.matmul %1, %2, %cst {dimension_numbers = #tpu.dot_dimension_numbers<[1], [0], [0], [1], [0, 0, 1, 1], [], []>} : vector<8x128xf32>, vector<128x128xf32>, vector<8x128xf32> -> vector<8x128xf32>
    %cst_3 = arith.constant 3.125000e-02 : f32
    %4 = vector.broadcast %cst_3 : f32 to vector<8x128xf32>
    %5 = arith.mulf %3, %4 : vector<8x128xf32>
    %cst_4 = arith.constant 9.99999997E-7 : f32
    %6 = vector.broadcast %cst_4 : f32 to vector<8x128xf32>
    %7 = arith.addf %5, %6 : vector<8x128xf32>
    %8 = math.rsqrt %7 : vector<8x128xf32>
    %9 = arith.mulf %0, %8 : vector<8x128xf32>
    %c0_5 = arith.constant 0 : index
    %c0_6 = arith.constant 0 : index
    %10 = vector.load %arg2[%c0_5, %c0_6] : memref<1x128xf32, #tpu.memory_space<vmem>>, vector<1x128xf32>
    %11 = vector.broadcast %10 : vector<1x128xf32> to vector<8x128xf32>
    %12 = arith.mulf %9, %11 : vector<8x128xf32>
    %c0_7 = arith.constant 0 : index
    %c0_8 = arith.constant 0 : index
    %13 = vector.load %arg4[%c0_7, %c0_8] : memref<8x128xf32, #tpu.memory_space<vmem>>, vector<8x128xf32>
    tpu.vector_store %arg4[%c0_7, %c0_8], %12 {strides = array<i32>} : memref<8x128xf32, #tpu.memory_space<vmem>>, vector<8x128xf32>,
    return
  }
  func.func @transform_0(%arg0: i32) -> (i32, i32) {
    %c0_i32 = arith.constant 0 : i32
    %c0_i32_0 = arith.constant 0 : i32
    return %arg0, %c0_i32 : i32, i32
  }
  func.func @transform_1(%arg0: i32) -> (i32, i32) {
    %c0_i32 = arith.constant 0 : i32
    %c0_i32_0 = arith.constant 0 : i32
    %c0_i32_1 = arith.constant 0 : i32
    return %c0_i32, %c0_i32_0 : i32, i32
  }
  func.func @transform_2(%arg0: i32) -> (i32, i32) {
    %c0_i32 = arith.constant 0 : i32
    %c0_i32_0 = arith.constant 0 : i32
    %c0_i32_1 = arith.constant 0 : i32
    return %c0_i32, %c0_i32_0 : i32, i32
  }
  func.func @transform_3(%arg0: i32) -> (i32, i32) {
    %c0_i32 = arith.constant 0 : i32
    %c0_i32_0 = arith.constant 0 : i32
    return %arg0, %c0_i32 : i32, i32
  }
}

</mosaic_0001>

<llo_original>
// kernel: tpu_custom_call.1
$region0: #{tpu_custom_call.1}
  #allocation0 [shape = 'u32[]', space=smem, size = 0x4, offset = 0x4, fixed_abs, tag = 'smem constant byte address 0x4 - core index']
  #allocation1 [shape = 'u32[144,128]{1,0:T(1,128)}', space=vmem, size = 0x12000, scoped, tag = 'internal scratch']
  %s0 = inlined_call_operand.hbm [shape: f32[4,128], index: 0, kind: input, shape index: {}]
  %s1 = inlined_call_operand.vmem [shape: f32[1,128], index: 1, kind: input, shape index: {}]
  %s2 = inlined_call_operand.hbm [shape: f32[128,128], index: 2, kind: input, shape index: {}]
  %s3 = inlined_call_operand.hbm [shape: f32[4,128], index: 3, kind: output, shape index: {}]
  %s4 = sld [smem:[#allocation0]]
  $region30: #{tpu_custom_call.1} parent=0
    _
  %s6 = ssub.s32 1, %s4
  %s7 = scalar_select 0, %s6, %s4
  $region1: #{tpu_custom_call.1} parent=0
    #allocation2 [shape = 'u8[4096]{0}', space=vmem, size = 0x1000, scoped, tag = 'input window, operand 0, single buffered']
    #allocation3 [shape = 's32[1]{0}', space=sflag, size = 0x4, scoped, tag = 'scoped memory for tpu_custom_call.1']
    #allocation4 [shape = 's32[1]{0}', space=sflag, size = 0x4, scoped, tag = 'scoped memory for tpu_custom_call.1']
    #allocation5 [shape = 'u8[65536]{0}', space=vmem, size = 0x10000, scoped, tag = 'input window, operand 2, single buffered']
    #allocation6 [shape = 's32[1]{0}', space=sflag, size = 0x4, scoped, tag = 'scoped memory for tpu_custom_call.1']
    #allocation7 [shape = 'u8[4096]{0}', space=vmem, size = 0x1000, scoped, tag = 'output window, operand 0, single buffered']
    %8 = vsyncpa [#allocation3], 0
    %9 = vsyncpa [#allocation6], 0
    %10 = vsyncpa [#allocation4], 0
    // Predicated region
    $region2: #{tpu_custom_call.1} parent=1 // pred_check
      _
    $region3: #{tpu_custom_call.1} parent=1 // pred_check_branch
      %12 = sbr.rel (0) target = $region5
    $region4: #{tpu_custom_call.1} parent=1 // pred_region
      %s14 = ssub.s32 128, 64
      %15 = vsyncadd [#allocation3], %s14
      %s16 = sshll.u32 [#allocation2], 4
      %s17 = int_to_ptr.vmem [resolvable:$true] %s16
      %22 = dma.hbm_to_vmem [thread:$0]  %s0, 64, %s17, [#allocation3], 64, 64, 4
    $region5: #{tpu_custom_call.1} parent=1 // pred_fallthru
      _
    // Predicated region
    $region6: #{tpu_custom_call.1} parent=1 // pred_check
      _
    $region7: #{tpu_custom_call.1} parent=1 // pred_check_branch
      %24 = sbr.rel (0) target = $region9
    $region8: #{tpu_custom_call.1} parent=1 // pred_region
      _
    $region9: #{tpu_custom_call.1} parent=1 // pred_fallthru
      _
    // Predicated region
    $region10: #{tpu_custom_call.1} parent=1 // pred_check
      _
    $region11: #{tpu_custom_call.1} parent=1 // pred_check_branch
      %26 = sbr.rel (0) target = $region13
    $region12: #{tpu_custom_call.1} parent=1 // pred_region
      %s28 = ssub.s32 2048, 2048
      %29 = vsyncadd [#allocation6], %s28
      %s30 = sshll.u32 [#allocation5], 4
      %s31 = int_to_ptr.vmem [resolvable:$true] %s30
      %36 = dma.hbm_to_vmem [thread:$0]  %s2, 2048, %s31, [#allocation6], 128, 128, 8
    $region13: #{tpu_custom_call.1} parent=1 // pred_fallthru
      _
    // Predicated region
    $region14: #{tpu_custom_call.1} parent=1 // pred_check
      _
    $region15: #{tpu_custom_call.1} parent=1 // pred_check_branch
      %38 = sbr.rel (0) target = $region17
    $region16: #{tpu_custom_call.1} parent=1 // pred_region
      %39 = dma.done [#allocation3], 128
    $region17: #{tpu_custom_call.1} parent=1 // pred_fallthru
      _
    // Predicated region
    $region18: #{tpu_custom_call.1} parent=1 // pred_check
      _
    $region19: #{tpu_custom_call.1} parent=1 // pred_check_branch
      %41 = sbr.rel (0) target = $region21
    $region20: #{tpu_custom_call.1} parent=1 // pred_region
      %42 = dma.done [#allocation6], 2048
    $region21: #{tpu_custom_call.1} parent=1 // pred_fallthru
      _
    %v43 = vld [vmem:[#allocation2] sm:$0xff]
    %v44 = vmul.f32 %v43, %v43
    %v45 = vld [vmem:[#allocation5] sm:$0xff]
    %v46 = vld [vmem:[#allocation5 + $0x8] sm:$0xff]
    %v47 = vld [vmem:[#allocation5 + $0x10] sm:$0xff]
    %v48 = vld [vmem:[#allocation5 + $0x18] sm:$0xff]
    %v49 = vld [vmem:[#allocation5 + $0x20] sm:$0xff]
    %v50 = vld [vmem:[#allocation5 + $0x28] sm:$0xff]
    %v51 = vld [vmem:[#allocation5 + $0x30] sm:$0xff]
    %v52 = vld [vmem:[#allocation5 + $0x38] sm:$0xff]
    %v53 = vld [vmem:[#allocation5 + $0x40] sm:$0xff]
    %v54 = vld [vmem:[#allocation5 + $0x48] sm:$0xff]
    %v55 = vld [vmem:[#allocation5 + $0x50] sm:$0xff]
    %v56 = vld [vmem:[#allocation5 + $0x58] sm:$0xff]
    %v57 = vld [vmem:[#allocation5 + $0x60] sm:$0xff]
    %v58 = vld [vmem:[#allocation5 + $0x68] sm:$0xff]
    %v59 = vld [vmem:[#allocation5 + $0x70] sm:$0xff]
    %v60 = vld [vmem:[#allocation5 + $0x78] sm:$0xff]
    %61 = vmatprep.subr.mxu0 0.0
    %62 = vmatpush1.msra.mxu0 %v45
    %63 = vmatprep.subr.mxu0 0.0
    %64 = vmatpush1.msra.mxu0 %v46
    %65 = vmatprep.subr.mxu0 0.0
    %66 = vmatpush1.msra.mxu0 %v47
    %67 = vmatprep.subr.mxu0 0.0
    %68 = vmatpush1.msra.mxu0 %v48
    %69 = vmatprep.subr.mxu0 0.0
    %70 = vmatpush1.msra.mxu0 %v49
    %71 = vmatprep.subr.mxu0 0.0
    %72 = vmatpush1.msra.mxu0 %v50
    %73 = vmatprep.subr.mxu0 0.0
    %74 = vmatpush1.msra.mxu0 %v51
    %75 = vmatprep.subr.mxu0 0.0
    %76 = vmatpush1.msra.mxu0 %v52
    %77 = vmatprep.subr.mxu0 0.0
    %78 = vmatpush1.msra.mxu0 %v53
    %79 = vmatprep.subr.mxu0 0.0
    %80 = vmatpush1.msra.mxu0 %v54
    %81 = vmatprep.subr.mxu0 0.0
    %82 = vmatpush1.msra.mxu0 %v55
    %83 = vmatprep.subr.mxu0 0.0
    %84 = vmatpush1.msra.mxu0 %v56
    %85 = vmatprep.subr.mxu0 0.0
    %86 = vmatpush1.msra.mxu0 %v57
    %87 = vmatprep.subr.mxu0 0.0
    %88 = vmatpush1.msra.mxu0 %v58
    %89 = vmatprep.subr.mxu0 0.0
    %90 = vmatpush1.msra.mxu0 %v59
    %91 = vmatprep.subr.mxu0 0.0
    %92 = vmatpush1.msra.mxu0 %v60
    %93 = vmatprep.subr.mxu0 0.0
    %94 = vmatpush1.msra.mxu0 0.0
    %95 = vmatprep.subr.mxu0 0.0
    %96 = vmatpush1.msra.mxu0 0.0
    %97 = vmatprep.subr.mxu0 0.0
    %98 = vmatpush1.msra.mxu0 0.0
    %99 = vmatprep.subr.mxu0 0.0
    %100 = vmatpush1.msra.mxu0 0.0
    %101 = vmatprep.subr.mxu0 0.0
    %102 = vmatpush1.msra.mxu0 0.0
    %103 = vmatprep.subr.mxu0 0.0
    %104 = vmatpush1.msra.mxu0 0.0
    %105 = vmatprep.subr.mxu0 0.0
    %106 = vmatpush1.msra.mxu0 0.0
    %107 = vmatprep.subr.mxu0 0.0
    %108 = vmatpush1.msra.mxu0 0.0
    %109 = vmatprep.subr.mxu0 0.0
    %110 = vmatpush1.msra.mxu0 0.0
    %111 = vmatprep.subr.mxu0 0.0
    %112 = vmatpush1.msra.mxu0 0.0
    %113 = vmatprep.subr.mxu0 0.0
    %114 = vmatpush1.msra.mxu0 0.0
    %115 = vmatprep.subr.mxu0 0.0
    %116 = vmatpush1.msra.mxu0 0.0
    %117 = vmatprep.subr.mxu0 0.0
    %118 = vmatpush1.msra.mxu0 0.0
    %119 = vmatprep.subr.mxu0 0.0
    %120 = vmatpush1.msra.mxu0 0.0
    %121 = vmatprep.subr.mxu0 0.0
    %122 = vmatpush1.msra.mxu0 0.0
    %123 = vmatprep.subr.mxu0 0.0
    %124 = vmatpush1.msra.mxu0 0.0
    %125 = vmatprep.mubr.f32.mxu0 0.0
    %126 = vmatmul.mubr.f32.gmra.mrb[0].mxu0 %v44
    %v127 = vpop.f32.mrb[0].mxu0
    %v128 = vadd.f32 0.0, %v127
    %v129 = vpop.f32.mrb[0].mxu0
    %130 = vdwg.mxu0
    %v131 = vmul.f32 %v128, 0.03125
    %v132 = vadd.f32 %v131, 1e-06
    %v133 = vrsqrt.pop %v132
    %v134 = vmul.f32 %v43, %v133
    %v135 = vld [vmem:[%s1] sm:$0x1]
    %v137 = vlaneseq
    %v138 = vshrl.u32 %v137, 7
    %v139 = vsub.s32 0, %v138
    %v140 = vrot.slane %v135, %v139
    %v142 = vmul.f32 %v134, %v140
    %143 = vst [vmem:[#allocation7] sm:$0xff] %v142
    // Predicated region
    $region22: #{tpu_custom_call.1} parent=1 // pred_check
      _
    $region23: #{tpu_custom_call.1} parent=1 // pred_check_branch
      %145 = sbr.rel (0) target = $region25
    $region24: #{tpu_custom_call.1} parent=1 // pred_region
      %s147 = ssub.s32 128, 64
      %148 = vsyncadd [#allocation4], %s147
      %s149 = sshll.u32 [#allocation7], 4
      %s150 = int_to_ptr.vmem [resolvable:$true] %s149
      %155 = dma.vmem_to_hbm [thread:$0]  %s150, 64, %s3, [#allocation4], 64, 64, 4
    $region25: #{tpu_custom_call.1} parent=1 // pred_fallthru
      _
    // Predicated region
    $region26: #{tpu_custom_call.1} parent=1 // pred_check
      _
    $region27: #{tpu_custom_call.1} parent=1 // pred_check_branch
      %157 = sbr.rel (0) target = $region29
    $region28: #{tpu_custom_call.1} parent=1 // pred_region
      %158 = dma.done [#allocation4], 128
    $region29: #{tpu_custom_call.1} parent=1 // pred_fallthru
      _
    %159 = vsyncpa [#allocation3], 1
    %160 = vsyncpa [#allocation6], 1
    %161 = vsyncpa [#allocation4], 1

</llo_original>
